<compile_context>
chip_gen: v7x
topology: tpu7x:2x2x1
jax: 0.10.0
libtpu: 0.0.40
codegen_flags: <defaults>
</compile_context>

<pallas_src>
import jax
import jax.numpy as jnp
from jax.experimental import pallas as pl
from jax.experimental.pallas import tpu as pltpu

F = 128                       # padded lane (feature) width: one vreg lane width
D_STATE = 2                   # x_k / x_k1_pred feature dim (W4 / W8 output)
D_CTRL = 2                    # u_k / u_k1 feature dim
U1_LANE = D_STATE + D_CTRL    # lane offset where u_k1 is stored in the row stream


# --------------------------------------------------------------------------
# Kernel: all 8 Linear + tanh layers for one row tile.
# --------------------------------------------------------------------------
def _mlp_kernel(xu_ref, w_ref, b_ref, out_ref):
    """
    xu_ref : (TM, F) bf16  x_k at lanes [0:2], u_k at [2:4], u_k1 at [4:6]
    w_ref  : (8, F, F) bf16  packed (in, out) weights:
                             W5 u_k1-rows at rows [4:6]; W8 outputs at cols [2:4]
    b_ref  : (8, 1, F) f32   packed biases (b8 at lanes [2:4])
    out_ref: (TM, F) f32   x_k1_pred at lanes [0:2], x_k2_pred at lanes [2:4]
    """
    def layer(x, k):
        acc = jnp.dot(x.astype(jnp.bfloat16), w_ref[k],
                      preferred_element_type=jnp.float32)
        return jnp.tanh(acc + b_ref[k])

    xu = xu_ref[...]                                        # bf16 (TM, F)

    # u_k1 extracted from the same row stream (lanes >= U1_LANE are u_k1 or 0).
    lane = jax.lax.broadcasted_iota(jnp.int32, xu_ref.shape, 1)
    u1 = jnp.where(lane >= U1_LANE, xu, jnp.zeros_like(xu)).astype(jnp.float32)

    h = layer(xu, 0)                   # tanh(W1(cat(x_k, u_k)))  (u_k1 rows of W1 are 0)
    h = layer(h, 1)                    # tanh(W2(.))
    h = layer(h, 2)                    # tanh(W3(.))
    xk1 = layer(h, 3)                  # x_k1_pred; lanes >= 2 are exactly 0

    h = layer(xk1 + u1, 4)             # cat(x_k1_pred, u_k1) via lane layout + shifted W5 rows
    h = layer(h, 5)
    h = layer(h, 6)
    xk2 = layer(h, 7)                  # x_k2_pred at lanes [2:4] (shifted W8 cols)

    out_ref[...] = xk1 + xk2           # both heads packed into one lane-dense writeback


# --------------------------------------------------------------------------
# Host-side helpers.
# --------------------------------------------------------------------------
def _round_up(x, m):
    return ((x + m - 1) // m) * m


def _choose_tm(m):
    """Row-tile size: big enough to feed the MXU, >=2 grid steps when possible."""
    mr = _round_up(max(m, 1), 8)
    if mr <= 8:
        return 8
    if mr <= 512:
        return min(256, _round_up((mr + 1) // 2, 8))   # 2 parallel steps (v7x megacore)
    return 256


def init_params(key):
    """Deterministic init mimicking nn.Linear shapes: W (out,in), b (out,)."""
    dims = [  # (in, out) for W1..W8
        (4, 12), (12, 24), (24, 8), (8, 2),
        (4, 12), (12, 24), (24, 8), (8, 2),
    ]
    params = []
    for (din, dout) in dims:
        key, kw, kb = jax.random.split(key, 3)
        bound = 1.0 / jnp.sqrt(din)
        W = jax.random.uniform(kw, (dout, din), jnp.float32, -bound, bound)
        b = jax.random.uniform(kb, (dout,), jnp.float32, -bound, bound)
        params.append((W, b))
    return params


def prep_packed_params(params):
    """Pack all 8 layers into one (8,F,F) bf16 weight slab + (8,1,F) f32 bias slab."""
    Ws = jnp.zeros((8, F, F), jnp.float32)
    Bs = jnp.zeros((8, 1, F), jnp.float32)
    for k, (W, b) in enumerate(params):
        dout, din = W.shape
        col0 = D_STATE if k == 7 else 0            # shift W8 outputs to lanes [2:4]
        if k == 4:
            # W5: x_k1_pred rows at [0:2], u_k1 rows at [4:6] (match row stream layout).
            Ws = Ws.at[k, 0:D_STATE, col0:col0 + dout].set(
                W[:, :D_STATE].T.astype(jnp.float32))
            Ws = Ws.at[k, U1_LANE:U1_LANE + D_CTRL, col0:col0 + dout].set(
                W[:, D_STATE:].T.astype(jnp.float32))
        else:
            Ws = Ws.at[k, :din, col0:col0 + dout].set(W.T.astype(jnp.float32))
        Bs = Bs.at[k, 0, col0:col0 + dout].set(b.astype(jnp.float32))
    return Ws.astype(jnp.bfloat16), Bs


@jax.jit
def ml_model_forward(w_packed, b_packed, x_k, u_k, u_k1):
    B, S, dx = x_k.shape
    du = u_k.shape[-1]
    du1 = u_k1.shape[-1]
    assert dx == D_STATE and du == D_CTRL and du1 == D_CTRL
    M = B * S
    TM = _choose_tm(M)
    Mpad = _round_up(M, TM)

    # One packed row stream: x_k at [0:2], u_k at [2:4], u_k1 at [4:6], zero-padded.
    rows = jnp.concatenate(
        [x_k.reshape(M, dx), u_k.reshape(M, du), u_k1.reshape(M, du1)], axis=1)
    xu = jnp.pad(rows, ((0, Mpad - M), (0, F - (dx + du + du1))))
    xu = xu.astype(jnp.bfloat16)

    row_in_spec = pl.BlockSpec((TM, F), lambda i: (i, 0))
    row_out_spec = pl.BlockSpec((TM, F), lambda i: (i, 0))
    w_spec = pl.BlockSpec((8, F, F), lambda i: (0, 0, 0))    # resident weights
    b_spec = pl.BlockSpec((8, 1, F), lambda i: (0, 0, 0))    # resident biases

    out = pl.pallas_call(
        _mlp_kernel,
        out_shape=jax.ShapeDtypeStruct((Mpad, F), jnp.float32),
        grid_spec=pltpu.PrefetchScalarGridSpec(
            num_scalar_prefetch=0,
            grid=(Mpad // TM,),
            in_specs=[row_in_spec, w_spec, b_spec],
            out_specs=row_out_spec,
        ),
        compiler_params=pltpu.CompilerParams(
            dimension_semantics=("parallel",)),
    )(xu, w_packed, b_packed)

    x_k1_pred = out[:M, :D_STATE].reshape(B, S, D_STATE)
    x_k2_pred = out[:M, D_STATE:2 * D_STATE].reshape(B, S, D_STATE)
    return x_k1_pred, x_k2_pred


# --------------------------------------------------------------------------
# Pure-JAX references.
# --------------------------------------------------------------------------
def _f32_reference(params, x_k, u_k, u_k1):
    """Exact mirror of the PyTorch forward, full f32."""
    def lin(p, x):
        W, b = p
        return jnp.tanh(x @ W.T + b)
    h = lin(params[0], jnp.concatenate((x_k, u_k), axis=2))
    h = lin(params[1], h)
    h = lin(params[2], h)
    xk1 = lin(params[3], h)
    h = lin(params[4], jnp.concatenate((xk1, u_k1), axis=2))
    h = lin(params[5], h)
    h = lin(params[6], h)
    xk2 = lin(params[7], h)
    return xk1, xk2


def _matched_reference(params, x_k, u_k, u_k1):
    """Mirror of the kernel's precision: bf16 weights & dot inputs, f32 acc/tanh."""
    def q(a):
        return a.astype(jnp.bfloat16).astype(jnp.float32)

    def lin(p, x):
        W, b = p
        return jnp.tanh(q(x) @ q(W).T + b)
    h = lin(params[0], jnp.concatenate((x_k, u_k), axis=2))
    h = lin(params[1], h)
    h = lin(params[2], h)
    xk1 = lin(params[3], h)
    h = lin(params[4], jnp.concatenate((xk1, u_k1), axis=2))
    h = lin(params[5], h)
    h = lin(params[6], h)
    xk2 = lin(params[7], h)
    return xk1, xk2


if __name__ == "__main__":
    key = jax.random.PRNGKey(0)
    kp, kx, ku, ku1 = jax.random.split(key, 4)

    params = init_params(kp)
    w_packed, b_packed = prep_packed_params(params)

    B, S = 2, 8            # batch=2, seq=8; state dim 2, control dim 2
    x_k = jax.random.normal(kx, (B, S, D_STATE), jnp.float32)
    u_k = jax.random.normal(ku, (B, S, D_CTRL), jnp.float32)
    u_k1 = jax.random.normal(ku1, (B, S, D_CTRL), jnp.float32)

    x_k1_pred, x_k2_pred = ml_model_forward(w_packed, b_packed, x_k, u_k, u_k1)
    jax.block_until_ready((x_k1_pred, x_k2_pred))

    # Tight check vs a reference that mirrors the kernel's bf16/f32 precision.
    r1, r2 = _matched_reference(params, x_k, u_k, u_k1)
    assert jnp.allclose(x_k1_pred, r1, atol=2e-3), "x_k1_pred mismatch (matched ref)"
    assert jnp.allclose(x_k2_pred, r2, atol=2e-3), "x_k2_pred mismatch (matched ref)"

    # Loose sanity vs the full-f32 PyTorch-equivalent forward (bf16 weight
    # quantization introduces a small drift through the 8 tanh layers).
    f1, f2 = _f32_reference(params, x_k, u_k, u_k1)
    assert jnp.allclose(x_k1_pred, f1, atol=1e-1), "x_k1_pred drift vs f32 ref"
    assert jnp.allclose(x_k2_pred, f2, atol=1e-1), "x_k2_pred drift vs f32 ref"

    print("KERNEL_OK")
</pallas_src>

<mosaic_0001>
module attributes {stable_mosaic.version = 11 : i64} {
  func.func @_mlp_kernel(%arg0: i32, %arg1: memref<8x128xbf16, #tpu.memory_space<vmem>>, %arg2: memref<8x128x128xbf16, #tpu.memory_space<vmem>>, %arg3: memref<8x1x128xf32, #tpu.memory_space<vmem>>, %arg4: memref<8x128xf32, #tpu.memory_space<vmem>>) attributes {dimension_semantics = [#tpu.dimension_semantics<parallel>], iteration_bounds = array<i64: 2>, scalar_prefetch = 0 : i64, scratch_operands = 0 : i64, tpu.core_type = #tpu.core_type<tc>, window_params = [{transform_indices = @transform_0, window_bounds = array<i64: 8, 128>}, {pipeline_mode = #tpu.pipeline_mode<synchronous>, transform_indices = @transform_1, window_bounds = array<i64: 8, 128, 128>}, {pipeline_mode = #tpu.pipeline_mode<synchronous>, transform_indices = @transform_2, window_bounds = array<i64: 8, 1, 128>}, {transform_indices = @transform_3, window_bounds = array<i64: 8, 128>}]} {
    %c0 = arith.constant 0 : index
    %c0_0 = arith.constant 0 : index
    %0 = vector.load %arg1[%c0, %c0_0] : memref<8x128xbf16, #tpu.memory_space<vmem>>, vector<8x128xbf16>
    %1 = tpu.iota {dimensions = array<i32: 1>} : vector<8x128xi32>
    %c4_i32 = arith.constant 4 : i32
    %2 = vector.broadcast %c4_i32 : i32 to vector<8x128xi32>
    %3 = arith.cmpi sge, %1, %2 : vector<8x128xi32>
    %cst = arith.constant 0.000000e+00 : bf16
    %4 = vector.broadcast %cst : bf16 to vector<8x128xbf16>
    %5 = arith.select %3, %0, %4 : vector<8x128xi1>, vector<8x128xbf16>
    %6 = arith.extf %5 : vector<8x128xbf16> to vector<8x128xf32>
    %c0_1 = arith.constant 0 : index
    %c0_2 = arith.constant 0 : index
    %c0_3 = arith.constant 0 : index
    %7 = vector.load %arg2[%c0_1, %c0_2, %c0_3] : memref<8x128x128xbf16, #tpu.memory_space<vmem>>, vector<1x128x128xbf16>
    %8 = vector.shape_cast %7 : vector<1x128x128xbf16> to vector<128x128xbf16>
    %cst_4 = arith.constant dense<0.000000e+00> : vector<8x128xf32>
    %9 = tpu.matmul %0, %8, %cst_4 {dimension_numbers = #tpu.dot_dimension_numbers<[1], [0], [0], [1], [0, 0, 1, 1], [], []>} : vector<8x128xbf16>, vector<128x128xbf16>, vector<8x128xf32> -> vector<8x128xf32>
    %c0_5 = arith.constant 0 : index
    %c0_6 = arith.constant 0 : index
    %c0_7 = arith.constant 0 : index
    %10 = vector.load %arg3[%c0_5, %c0_6, %c0_7] : memref<8x1x128xf32, #tpu.memory_space<vmem>>, vector<1x1x128xf32>
    %11 = vector.shape_cast %10 : vector<1x1x128xf32> to vector<1x128xf32>
    %12 = vector.broadcast %11 : vector<1x128xf32> to vector<8x128xf32>
    %13 = arith.addf %9, %12 : vector<8x128xf32>
    %14 = math.tanh %13 : vector<8x128xf32>
    %15 = arith.truncf %14 : vector<8x128xf32> to vector<8x128xbf16>
    %c1 = arith.constant 1 : index
    %c0_8 = arith.constant 0 : index
    %c0_9 = arith.constant 0 : index
    %16 = vector.load %arg2[%c1, %c0_8, %c0_9] : memref<8x128x128xbf16, #tpu.memory_space<vmem>>, vector<1x128x128xbf16>
    %17 = vector.shape_cast %16 : vector<1x128x128xbf16> to vector<128x128xbf16>
    %cst_10 = arith.constant dense<0.000000e+00> : vector<8x128xf32>
    %18 = tpu.matmul %15, %17, %cst_10 {dimension_numbers = #tpu.dot_dimension_numbers<[1], [0], [0], [1], [0, 0, 1, 1], [], []>} : vector<8x128xbf16>, vector<128x128xbf16>, vector<8x128xf32> -> vector<8x128xf32>
    %c1_11 = arith.constant 1 : index
    %c0_12 = arith.constant 0 : index
    %c0_13 = arith.constant 0 : index
    %19 = vector.load %arg3[%c1_11, %c0_12, %c0_13] : memref<8x1x128xf32, #tpu.memory_space<vmem>>, vector<1x1x128xf32>
    %20 = vector.shape_cast %19 : vector<1x1x128xf32> to vector<1x128xf32>
    %21 = vector.broadcast %20 : vector<1x128xf32> to vector<8x128xf32>
    %22 = arith.addf %18, %21 : vector<8x128xf32>
    %23 = math.tanh %22 : vector<8x128xf32>
    %24 = arith.truncf %23 : vector<8x128xf32> to vector<8x128xbf16>
    %c2 = arith.constant 2 : index
    %c0_14 = arith.constant 0 : index
    %c0_15 = arith.constant 0 : index
    %25 = vector.load %arg2[%c2, %c0_14, %c0_15] : memref<8x128x128xbf16, #tpu.memory_space<vmem>>, vector<1x128x128xbf16>
    %26 = vector.shape_cast %25 : vector<1x128x128xbf16> to vector<128x128xbf16>
    %cst_16 = arith.constant dense<0.000000e+00> : vector<8x128xf32>
    %27 = tpu.matmul %24, %26, %cst_16 {dimension_numbers = #tpu.dot_dimension_numbers<[1], [0], [0], [1], [0, 0, 1, 1], [], []>} : vector<8x128xbf16>, vector<128x128xbf16>, vector<8x128xf32> -> vector<8x128xf32>
    %c2_17 = arith.constant 2 : index
    %c0_18 = arith.constant 0 : index
    %c0_19 = arith.constant 0 : index
    %28 = vector.load %arg3[%c2_17, %c0_18, %c0_19] : memref<8x1x128xf32, #tpu.memory_space<vmem>>, vector<1x1x128xf32>
    %29 = vector.shape_cast %28 : vector<1x1x128xf32> to vector<1x128xf32>
    %30 = vector.broadcast %29 : vector<1x128xf32> to vector<8x128xf32>
    %31 = arith.addf %27, %30 : vector<8x128xf32>
    %32 = math.tanh %31 : vector<8x128xf32>
    %33 = arith.truncf %32 : vector<8x128xf32> to vector<8x128xbf16>
    %c3 = arith.constant 3 : index
    %c0_20 = arith.constant 0 : index
    %c0_21 = arith.constant 0 : index
    %34 = vector.load %arg2[%c3, %c0_20, %c0_21] : memref<8x128x128xbf16, #tpu.memory_space<vmem>>, vector<1x128x128xbf16>
    %35 = vector.shape_cast %34 : vector<1x128x128xbf16> to vector<128x128xbf16>
    %cst_22 = arith.constant dense<0.000000e+00> : vector<8x128xf32>
    %36 = tpu.matmul %33, %35, %cst_22 {dimension_numbers = #tpu.dot_dimension_numbers<[1], [0], [0], [1], [0, 0, 1, 1], [], []>} : vector<8x128xbf16>, vector<128x128xbf16>, vector<8x128xf32> -> vector<8x128xf32>
    %c3_23 = arith.constant 3 : index
    %c0_24 = arith.constant 0 : index
    %c0_25 = arith.constant 0 : index
    %37 = vector.load %arg3[%c3_23, %c0_24, %c0_25] : memref<8x1x128xf32, #tpu.memory_space<vmem>>, vector<1x1x128xf32>
    %38 = vector.shape_cast %37 : vector<1x1x128xf32> to vector<1x128xf32>
    %39 = vector.broadcast %38 : vector<1x128xf32> to vector<8x128xf32>
    %40 = arith.addf %36, %39 : vector<8x128xf32>
    %41 = math.tanh %40 : vector<8x128xf32>
    %42 = arith.addf %41, %6 : vector<8x128xf32>
    %43 = arith.truncf %42 : vector<8x128xf32> to vector<8x128xbf16>
    %c4 = arith.constant 4 : index
    %c0_26 = arith.constant 0 : index
    %c0_27 = arith.constant 0 : index
    %44 = vector.load %arg2[%c4, %c0_26, %c0_27] : memref<8x128x128xbf16, #tpu.memory_space<vmem>>, vector<1x128x128xbf16>
    %45 = vector.shape_cast %44 : vector<1x128x128xbf16> to vector<128x128xbf16>
    %cst_28 = arith.constant dense<0.000000e+00> : vector<8x128xf32>
    %46 = tpu.matmul %43, %45, %cst_28 {dimension_numbers = #tpu.dot_dimension_numbers<[1], [0], [0], [1], [0, 0, 1, 1], [], []>} : vector<8x128xbf16>, vector<128x128xbf16>, vector<8x128xf32> -> vector<8x128xf32>
    %c4_29 = arith.constant 4 : index
    %c0_30 = arith.constant 0 : index
    %c0_31 = arith.constant 0 : index
    %47 = vector.load %arg3[%c4_29, %c0_30, %c0_31] : memref<8x1x128xf32, #tpu.memory_space<vmem>>, vector<1x1x128xf32>
    %48 = vector.shape_cast %47 : vector<1x1x128xf32> to vector<1x128xf32>
    %49 = vector.broadcast %48 : vector<1x128xf32> to vector<8x128xf32>
    %50 = arith.addf %46, %49 : vector<8x128xf32>
    %51 = math.tanh %50 : vector<8x128xf32>
    %52 = arith.truncf %51 : vector<8x128xf32> to vector<8x128xbf16>
    %c5 = arith.constant 5 : index
    %c0_32 = arith.constant 0 : index
    %c0_33 = arith.constant 0 : index
    %53 = vector.load %arg2[%c5, %c0_32, %c0_33] : memref<8x128x128xbf16, #tpu.memory_space<vmem>>, vector<1x128x128xbf16>
    %54 = vector.shape_cast %53 : vector<1x128x128xbf16> to vector<128x128xbf16>
    %cst_34 = arith.constant dense<0.000000e+00> : vector<8x128xf32>
    %55 = tpu.matmul %52, %54, %cst_34 {dimension_numbers = #tpu.dot_dimension_numbers<[1], [0], [0], [1], [0, 0, 1, 1], [], []>} : vector<8x128xbf16>, vector<128x128xbf16>, vector<8x128xf32> -> vector<8x128xf32>
    %c5_35 = arith.constant 5 : index
    %c0_36 = arith.constant 0 : index
    %c0_37 = arith.constant 0 : index
    %56 = vector.load %arg3[%c5_35, %c0_36, %c0_37] : memref<8x1x128xf32, #tpu.memory_space<vmem>>, vector<1x1x128xf32>
    %57 = vector.shape_cast %56 : vector<1x1x128xf32> to vector<1x128xf32>
    %58 = vector.broadcast %57 : vector<1x128xf32> to vector<8x128xf32>
    %59 = arith.addf %55, %58 : vector<8x128xf32>
    %60 = math.tanh %59 : vector<8x128xf32>
    %61 = arith.truncf %60 : vector<8x128xf32> to vector<8x128xbf16>
    %c6 = arith.constant 6 : index
    %c0_38 = arith.constant 0 : index
    %c0_39 = arith.constant 0 : index
    %62 = vector.load %arg2[%c6, %c0_38, %c0_39] : memref<8x128x128xbf16, #tpu.memory_space<vmem>>, vector<1x128x128xbf16>
    %63 = vector.shape_cast %62 : vector<1x128x128xbf16> to vector<128x128xbf16>
    %cst_40 = arith.constant dense<0.000000e+00> : vector<8x128xf32>
    %64 = tpu.matmul %61, %63, %cst_40 {dimension_numbers = #tpu.dot_dimension_numbers<[1], [0], [0], [1], [0, 0, 1, 1], [], []>} : vector<8x128xbf16>, vector<128x128xbf16>, vector<8x128xf32> -> vector<8x128xf32>
    %c6_41 = arith.constant 6 : index
    %c0_42 = arith.constant 0 : index
    %c0_43 = arith.constant 0 : index
    %65 = vector.load %arg3[%c6_41, %c0_42, %c0_43] : memref<8x1x128xf32, #tpu.memory_space<vmem>>, vector<1x1x128xf32>
    %66 = vector.shape_cast %65 : vector<1x1x128xf32> to vector<1x128xf32>
    %67 = vector.broadcast %66 : vector<1x128xf32> to vector<8x128xf32>
    %68 = arith.addf %64, %67 : vector<8x128xf32>
    %69 = math.tanh %68 : vector<8x128xf32>
    %70 = arith.truncf %69 : vector<8x128xf32> to vector<8x128xbf16>
    %c7 = arith.constant 7 : index
    %c0_44 = arith.constant 0 : index
    %c0_45 = arith.constant 0 : index
    %71 = vector.load %arg2[%c7, %c0_44, %c0_45] : memref<8x128x128xbf16, #tpu.memory_space<vmem>>, vector<1x128x128xbf16>
    %72 = vector.shape_cast %71 : vector<1x128x128xbf16> to vector<128x128xbf16>
    %cst_46 = arith.constant dense<0.000000e+00> : vector<8x128xf32>
    %73 = tpu.matmul %70, %72, %cst_46 {dimension_numbers = #tpu.dot_dimension_numbers<[1], [0], [0], [1], [0, 0, 1, 1], [], []>} : vector<8x128xbf16>, vector<128x128xbf16>, vector<8x128xf32> -> vector<8x128xf32>
    %c7_47 = arith.constant 7 : index
    %c0_48 = arith.constant 0 : index
    %c0_49 = arith.constant 0 : index
    %74 = vector.load %arg3[%c7_47, %c0_48, %c0_49] : memref<8x1x128xf32, #tpu.memory_space<vmem>>, vector<1x1x128xf32>
    %75 = vector.shape_cast %74 : vector<1x1x128xf32> to vector<1x128xf32>
    %76 = vector.broadcast %75 : vector<1x128xf32> to vector<8x128xf32>
    %77 = arith.addf %73, %76 : vector<8x128xf32>
    %78 = math.tanh %77 : vector<8x128xf32>
    %79 = arith.addf %41, %78 : vector<8x128xf32>
    %c0_50 = arith.constant 0 : index
    %c0_51 = arith.constant 0 : index
    %80 = vector.load %arg4[%c0_50, %c0_51] : memref<8x128xf32, #tpu.memory_space<vmem>>, vector<8x128xf32>
    tpu.vector_store %arg4[%c0_50, %c0_51], %79 {strides = array<i32>} : memref<8x128xf32, #tpu.memory_space<vmem>>, vector<8x128xf32>,
    return
  }
  func.func @transform_0(%arg0: i32) -> (i32, i32) {
    %c0_i32 = arith.constant 0 : i32
    %c0_i32_0 = arith.constant 0 : i32
    return %arg0, %c0_i32 : i32, i32
  }
  func.func @transform_1(%arg0: i32) -> (i32, i32, i32) {
    %c0_i32 = arith.constant 0 : i32
    %c0_i32_0 = arith.constant 0 : i32
    %c0_i32_1 = arith.constant 0 : i32
    %c0_i32_2 = arith.constant 0 : i32
    return %c0_i32, %c0_i32_0, %c0_i32_1 : i32, i32, i32
  }
  func.func @transform_2(%arg0: i32) -> (i32, i32, i32) {
    %c0_i32 = arith.constant 0 : i32
    %c0_i32_0 = arith.constant 0 : i32
    %c0_i32_1 = arith.constant 0 : i32
    %c0_i32_2 = arith.constant 0 : i32
    return %c0_i32, %c0_i32_0, %c0_i32_1 : i32, i32, i32
  }
  func.func @transform_3(%arg0: i32) -> (i32, i32) {
    %c0_i32 = arith.constant 0 : i32
    %c0_i32_0 = arith.constant 0 : i32
    return %arg0, %c0_i32 : i32, i32
  }
}

</mosaic_0001>

<llo_original>
// kernel: ml_model_forward.1
$region0: #{ml_model_forward.1}
  #allocation0 [shape = 'u32[]', space=smem, size = 0x4, offset = 0x4, fixed_abs, tag = 'smem constant byte address 0x4 - core index']
  #allocation1 [shape = 'u32[144,128]{1,0:T(1,128)}', space=vmem, size = 0x12000, scoped, tag = 'internal scratch']
  %s0 = inlined_call_operand.vmem [shape: bf16[16,128], index: 0, kind: input, shape index: {}]
  %s1 = inlined_call_operand.hbm [shape: bf16[8,128,128], index: 1, kind: input, shape index: {}]
  %s2 = inlined_call_operand.vmem [shape: f32[8,1,128], index: 2, kind: input, shape index: {}]
  %s3 = inlined_call_operand.vmem [shape: f32[16,128], index: 3, kind: output, shape index: {}]
  %s4 = sld [smem:[#allocation0]]
  $region49: #{ml_model_forward.1} parent=0
    _
  %s6 = ssub.s32 1, %s4
  %s7 = scalar_select 0, %s6, %s4
  $region1: #{ml_model_forward.1} parent=0
    #allocation2 [shape = 'u8[262144]{0}', space=vmem, size = 0x40000, scoped, tag = 'input window, operand 1, single buffered']
    #allocation3 [shape = 's32[2]{0}', space=sflag, size = 0x8, scoped, tag = 'scoped memory for ml_model_forward.1']
    %8 = vsyncpa [#allocation3], 0
    loop: start=0, step=1, limit=4
    $region2: #{ml_model_forward.1} parent=1 // loop_pre_header
      _
    $region3: #{ml_model_forward.1} parent=1 // loop_header
      %s10 = sphi 0, %s14
      %p11 = scmp.ge.s32.totalorder %s10, 4
      %s20 = sphi 0, %s22
      %s23 = sphi 0, %s20
      %s24 = sphi 0, %s23
      %s40 = sphi 0, %s24
      %s44 = sphi 0, %s44
      %s46 = sphi 0, %s44
      %s47 = sphi 0, %s46
      %s61 = sphi 0, %s47
      %s65 = sphi 0, %s65
      %s67 = sphi 0, %s65
      %s68 = sphi 0, %s67
      %s82 = sphi 0, %s68
      %s88 = sphi 0, %s90
      %s91 = sphi 0, %s88
      %s92 = sphi 0, %s91
      %s108 = sphi 0, %s92
    $region4: #{ml_model_forward.1} parent=1 // loop_header_branch
      %13 = sbr.rel (%p11) target = $region8
    $region5: #{ml_model_forward.1} parent=1 // loop_body
      %s15 = ssub.s32 %s10, 1
      %s16 = ssub.s32 %s10, 2
      %s17 = sadd.s32 %s10, 1
      %s18 = ssub.s32 %s10, %s17
      %p19 = scmp.eq.s32.totalorder %s18, 0
      %s21 = sadd.s32 %s20, 1
      %s22 = scalar_select %p19, %s20, %s21
      %p25 = pneg %p19
      %p26 = scmp.eq.s32.totalorder %s10, 1
      %p27 = por %p25, %p26
      %p28 = scmp.ne.s32.totalorder %s20, %s23
      %p29 = scmp.eq.s32.totalorder %s10, 0
      %p30 = por %p28, %p29
      %p31 = scmp.ne.s32.totalorder %s20, %s23
      %p32 = scmp.eq.s32.totalorder %s15, 1
      %p33 = por %p31, %p32
      %p34 = scmp.ne.s32.totalorder %s23, %s24
      %p35 = scmp.eq.s32.totalorder %s15, 0
      %p36 = por %p34, %p35
      %p37 = scmp.ne.s32.totalorder %s23, %s24
      %p38 = scmp.eq.s32.totalorder %s16, 1
      %p39 = por %p37, %p38
      %p41 = scmp.ne.s32.totalorder %s24, %s40
      %p42 = scmp.eq.s32.totalorder %s16, 0
      %p43 = por %p41, %p42
      %s45 = sadd.s32 %s44, 1
      %p48 = scmp.eq.s32.totalorder %s10, 1
      %p49 = scmp.ne.s32.totalorder %s44, %s46
      %p50 = scmp.eq.s32.totalorder %s10, 0
      %p51 = por %p49, %p50
      %p52 = scmp.ne.s32.totalorder %s44, %s46
      %p53 = scmp.eq.s32.totalorder %s15, 1
      %p54 = por %p52, %p53
      %p55 = scmp.ne.s32.totalorder %s46, %s47
      %p56 = scmp.eq.s32.totalorder %s15, 0
      %p57 = por %p55, %p56
      %p58 = scmp.ne.s32.totalorder %s46, %s47
      %p59 = scmp.eq.s32.totalorder %s16, 1
      %p60 = por %p58, %p59
      %p62 = scmp.ne.s32.totalorder %s47, %s61
      %p63 = scmp.eq.s32.totalorder %s16, 0
      %p64 = por %p62, %p63
      %s66 = sadd.s32 %s65, 1
      %p69 = scmp.eq.s32.totalorder %s10, 1
      %p70 = scmp.ne.s32.totalorder %s65, %s67
      %p71 = scmp.eq.s32.totalorder %s10, 0
      %p72 = por %p70, %p71
      %p73 = scmp.ne.s32.totalorder %s65, %s67
      %p74 = scmp.eq.s32.totalorder %s15, 1
      %p75 = por %p73, %p74
      %p76 = scmp.ne.s32.totalorder %s67, %s68
      %p77 = scmp.eq.s32.totalorder %s15, 0
      %p78 = por %p76, %p77
      %p79 = scmp.ne.s32.totalorder %s67, %s68
      %p80 = scmp.eq.s32.totalorder %s16, 1
      %p81 = por %p79, %p80
      %p83 = scmp.ne.s32.totalorder %s68, %s82
      %p84 = scmp.eq.s32.totalorder %s16, 0
      %p85 = por %p83, %p84
      %s86 = ssub.s32 %s10, %s17
      %p87 = scmp.eq.s32.totalorder %s86, 0
      %s89 = sadd.s32 %s88, 1
      %s90 = scalar_select %p87, %s88, %s89
      %p93 = pneg %p87
      %p94 = scmp.eq.s32.totalorder %s10, 1
      %p95 = por %p93, %p94
      %p96 = scmp.ne.s32.totalorder %s88, %s91
      %p97 = scmp.eq.s32.totalorder %s10, 0
      %p98 = por %p96, %p97
      %p99 = scmp.ne.s32.totalorder %s88, %s91
      %p100 = scmp.eq.s32.totalorder %s15, 1
      %p101 = por %p99, %p100
      %p102 = scmp.ne.s32.totalorder %s91, %s92
      %p103 = scmp.eq.s32.totalorder %s15, 0
      %p104 = por %p102, %p103
      %p105 = scmp.ne.s32.totalorder %s91, %s92
      %p106 = scmp.eq.s32.totalorder %s16, 1
      %p107 = por %p105, %p106
      %p109 = scmp.ne.s32.totalorder %s92, %s108
      %p110 = scmp.eq.s32.totalorder %s16, 0
      %p111 = por %p109, %p110
      %p112 = scmp.le.s32.totalorder 1, %s10
      %p113 = scmp.lt.s32.totalorder %s10, 3
      %p114 = pnand %p112, %p113
      %p115 = pneg %p114
      // Predicated region
      $region9: #{ml_model_forward.1} parent=5 // pred_check
        _
      $region10: #{ml_model_forward.1} parent=5 // pred_check_branch
        %117 = sbr.rel (%p114) target = $region12
      $region11: #{ml_model_forward.1} parent=5 // pred_region
        %s118 = ssub.s32 %s10, 1
        // Predicated region
        $region13: #{ml_model_forward.1} parent=11 // pred_check
          %p119 = pneg %p57
        $region14: #{ml_model_forward.1} parent=11 // pred_check_branch
          %121 = sbr.rel (%p119) target = $region16
        $region15: #{ml_model_forward.1} parent=11 // pred_region
          %s123 = ssub.s32 8192, 8192
          %124 = vsyncadd [#allocation3], %s123
          %s125 = sshll.u32 [#allocation2], 4
          %s126 = int_to_ptr.vmem [resolvable:$true] %s125
          %131 = dma.hbm_to_vmem [thread:$0]  %s1, 8192, %s126, [#allocation3], 64, 64, 4
        $region16: #{ml_model_forward.1} parent=11 // pred_fallthru
          _
        // Predicated region
        $region17: #{ml_model_forward.1} parent=11 // pred_check
          %p132 = pneg %p78
        $region18: #{ml_model_forward.1} parent=11 // pred_check_branch
          %134 = sbr.rel (%p132) target = $region20
        $region19: #{ml_model_forward.1} parent=11 // pred_region
          _
        $region20: #{ml_model_forward.1} parent=11 // pred_fallthru
          _
      $region12: #{ml_model_forward.1} parent=5 // pred_fallthru
        _
      %p135 = scmp.lt.s32.totalorder %s10, 2
      // Predicated region
      $region21: #{ml_model_forward.1} parent=5 // pred_check
        %p136 = pneg %p135
      $region22: #{ml_model_forward.1} parent=5 // pred_check_branch
        %138 = sbr.rel (%p136) target = $region24
      $region23: #{ml_model_forward.1} parent=5 // pred_region
        // Predicated region
        $region25: #{ml_model_forward.1} parent=23 // pred_check
          %p139 = pneg %p30
        $region26: #{ml_model_forward.1} parent=23 // pred_check_branch
          %141 = sbr.rel (%p139) target = $region28
        $region27: #{ml_model_forward.1} parent=23 // pred_region
          %p142 = scmp.lt.s32.totalorder %s10, 1
          %s143 = scalar_select %p142, %s10, 1
          %s144 = smul.addr %s143, 4
          %s145 = scalar_lea.vmem %s0, %s144
        $region28: #{ml_model_forward.1} parent=23 // pred_fallthru
          _
      $region24: #{ml_model_forward.1} parent=5 // pred_fallthru
        _
      %p146 = scmp.le.s32.totalorder 1, %s10
      %p147 = scmp.lt.s32.totalorder %s10, 3
      %p148 = pnand %p146, %p147
      %p149 = pneg %p148
      // Predicated region
      $region29: #{ml_model_forward.1} parent=5 // pred_check
        _
      $region30: #{ml_model_forward.1} parent=5 // pred_check_branch
        %151 = sbr.rel (%p148) target = $region32
      $region31: #{ml_model_forward.1} parent=5 // pred_region
        %s152 = ssub.s32 %s10, 1
        // Predicated region
        $region33: #{ml_model_forward.1} parent=31 // pred_check
          %p153 = pneg %p57
        $region34: #{ml_model_forward.1} parent=31 // pred_check_branch
          %155 = sbr.rel (%p153) target = $region36
        $region35: #{ml_model_forward.1} parent=31 // pred_region
          %156 = dma.done [#allocation3], 8192
        $region36: #{ml_model_forward.1} parent=31 // pred_fallthru
          _
        %p157 = scmp.lt.s32.totalorder %s15, 1
        %s158 = scalar_select %p157, %s15, 1
        %s159 = smul.addr %s158, 4
        %s160 = scalar_lea.vmem %s0, %s159
        %p161 = pneg %p36
        %p162 = pneg %p33
        %p163 = pneg %p57
        %p164 = pneg %p54
        %p165 = pneg %p78
        %p166 = pneg %p75
        %p167 = pneg %p104
        %p168 = pneg %p101
        %p169 = scmp.lt.s32.totalorder %s15, 1
        %s170 = scalar_select %p169, %s15, 1
        %s171 = smul.addr %s170, 8
        %s172 = scalar_lea.vmem %s3, %s171
        %p173 = scmp.lt.s32.totalorder %s15, 1
        %s174 = scalar_select %p173, %s15, 1
        %s175 = smul.addr %s174, 4
        %s176 = scalar_lea.vmem %s0, %s175
        %p177 = scmp.lt.s32.totalorder %s15, 1
        %s178 = scalar_select %p177, %s15, 1
        %s179 = smul.addr %s178, 8
        %s180 = scalar_lea.vmem %s3, %s179
        %v182 = vld [vmem:[%s176] sm:$0xf]
        %v183 = vlaneseq
        %v184 = vand.u32 %v183, 127
        %vm185 = vcmp.ge.s32.totalorder %v184, 4
        %vm186 = vmpackc.low %vm185, %vm185
        %v187 = vsel %vm186, %v182, 0
        %v188 = vunpack.c.l.bf16 %v187
        %v189 = vld [vmem:[#allocation2] sm:$0xf]
        %v190 = vld [vmem:[#allocation2 + $0x4] sm:$0xf]
        %v191 = vld [vmem:[#allocation2 + $0x8] sm:$0xf]
        %v192 = vld [vmem:[#allocation2 + $0xc] sm:$0xf]
        %v193 = vld [vmem:[#allocation2 + $0x10] sm:$0xf]
        %v194 = vld [vmem:[#allocation2 + $0x14] sm:$0xf]
        %v195 = vld [vmem:[#allocation2 + $0x18] sm:$0xf]
        %v196 = vld [vmem:[#allocation2 + $0x1c] sm:$0xf]
        %v197 = vld [vmem:[#allocation2 + $0x20] sm:$0xf]
        %v198 = vld [vmem:[#allocation2 + $0x24] sm:$0xf]
        %v199 = vld [vmem:[#allocation2 + $0x28] sm:$0xf]
        %v200 = vld [vmem:[#allocation2 + $0x2c] sm:$0xf]
        %v201 = vld [vmem:[#allocation2 + $0x30] sm:$0xf]
        %v202 = vld [vmem:[#allocation2 + $0x34] sm:$0xf]
        %v203 = vld [vmem:[#allocation2 + $0x38] sm:$0xf]
        %v204 = vld [vmem:[#allocation2 + $0x3c] sm:$0xf]
        %v205 = vld [vmem:[%s2] sm:$0x1]
        %v207 = vlaneseq
        %v208 = vshrl.u32 %v207, 7
        %v209 = vsub.s32 0, %v208
        %v210 = vrot.slane %v205, %v209
        %v228 = vunpack.c.l.b16 %v189
        %v229 = vunpack.c.l.b16 %v190
        %v230 = vunpack.c.l.b16 %v191
        %v231 = vunpack.c.l.b16 %v192
        %v232 = vunpack.c.l.b16 %v193
        %v233 = vunpack.c.l.b16 %v194
        %v234 = vunpack.c.l.b16 %v195
        %v235 = vunpack.c.l.b16 %v196
        %v236 = vunpack.c.l.b16 %v197
        %v237 = vunpack.c.l.b16 %v198
        %v238 = vunpack.c.l.b16 %v199
        %v239 = vunpack.c.l.b16 %v200
        %v240 = vunpack.c.l.b16 %v201
        %v241 = vunpack.c.l.b16 %v202
        %v242 = vunpack.c.l.b16 %v203
        %v243 = vunpack.c.l.b16 %v204
        %v244 = vpack.c.b16 %v229, %v228
        %v245 = vpack.c.b16 %v231, %v230
        %v246 = vpack.c.b16 %v233, %v232
        %v247 = vpack.c.b16 %v235, %v234
        %v248 = vpack.c.b16 %v237, %v236
        %v249 = vpack.c.b16 %v239, %v238
        %v250 = vpack.c.b16 %v241, %v240
        %v251 = vpack.c.b16 %v243, %v242
        %260 = vmatprep.subr.bf16.mxu0 0
        %261 = vmatpush1.bf16.msra.mxu0 %v244
        %262 = vmatprep.subr.bf16.mxu0 0
        %263 = vmatpush1.bf16.msra.mxu0 %v245
        %264 = vmatprep.subr.bf16.mxu0 0
        %265 = vmatpush1.bf16.msra.mxu0 %v246
        %266 = vmatprep.subr.bf16.mxu0 0
        %267 = vmatpush1.bf16.msra.mxu0 %v247
        %268 = vmatprep.subr.bf16.mxu0 0
        %269 = vmatpush1.bf16.msra.mxu0 %v248
        %270 = vmatprep.subr.bf16.mxu0 0
        %271 = vmatpush1.bf16.msra.mxu0 %v249
        %272 = vmatprep.subr.bf16.mxu0 0
        %273 = vmatpush1.bf16.msra.mxu0 %v250
        %274 = vmatprep.subr.bf16.mxu0 0
        %275 = vmatpush1.bf16.msra.mxu0 %v251
        %276 = vmatprep.subr.bf16.mxu0 0
        %277 = vmatpush1.bf16.msra.mxu0 0
        %278 = vmatprep.subr.bf16.mxu0 0
        %279 = vmatpush1.bf16.msra.mxu0 0
        %280 = vmatprep.subr.bf16.mxu0 0
        %281 = vmatpush1.bf16.msra.mxu0 0
        %282 = vmatprep.subr.bf16.mxu0 0
        %283 = vmatpush1.bf16.msra.mxu0 0
        %284 = vmatprep.subr.bf16.mxu0 0
        %285 = vmatpush1.bf16.msra.mxu0 0
        %286 = vmatprep.subr.bf16.mxu0 0
        %287 = vmatpush1.bf16.msra.mxu0 0
        %288 = vmatprep.subr.bf16.mxu0 0
        %289 = vmatpush1.bf16.msra.mxu0 0
        %290 = vmatprep.subr.bf16.mxu0 0
        %291 = vmatpush1.bf16.msra.mxu0 0
        %292 = vmatprep.mubr.bf16.mxu0 0
        %293 = vmatmul.mubr.bf16.gmra.mrb[0].mxu0 %v182
        %v294 = vpop.f32.mrb[0].mxu0
        %v295 = vadd.f32 %v210, %v294
        %v296 = vpop.f32.mrb[0].mxu0
        %v297 = vpop.f32.mrb[0].mxu0
        %v298 = vpop.f32.mrb[0].mxu0
        %299 = vdwg.mxu0
        %v300 = vtanh.pop %v295
        %v301 = vpack.c.bf16 %v300, %v300
        %s302 = scalar_lea.vmem [#allocation2], 64
        %v303 = vld [vmem:[%s302] sm:$0xf]
        %v304 = vld [vmem:[%s302 + $0x4] sm:$0xf]
        %v305 = vld [vmem:[%s302 + $0x8] sm:$0xf]
        %v306 = vld [vmem:[%s302 + $0xc] sm:$0xf]
        %v307 = vld [vmem:[%s302 + $0x10] sm:$0xf]
        %v308 = vld [vmem:[%s302 + $0x14] sm:$0xf]
        %v309 = vld [vmem:[%s302 + $0x18] sm:$0xf]
        %v310 = vld [vmem:[%s302 + $0x1c] sm:$0xf]
        %v311 = vld [vmem:[%s302 + $0x20] sm:$0xf]
        %v312 = vld [vmem:[%s302 + $0x24] sm:$0xf]
        %v313 = vld [vmem:[%s302 + $0x28] sm:$0xf]
        %v314 = vld [vmem:[%s302 + $0x2c] sm:$0xf]
        %v315 = vld [vmem:[%s302 + $0x30] sm:$0xf]
        %v316 = vld [vmem:[%s302 + $0x34] sm:$0xf]
        %v317 = vld [vmem:[%s302 + $0x38] sm:$0xf]
        %v318 = vld [vmem:[%s302 + $0x3c] sm:$0xf]
        %s319 = scalar_lea.vmem %s2, 1
        %v320 = vld [vmem:[%s319] sm:$0x1]
        %v322 = vlaneseq
        %v323 = vshrl.u32 %v322, 7
        %v324 = vsub.s32 0, %v323
        %v325 = vrot.slane %v320, %v324
        %v343 = vunpack.c.l.b16 %v303
        %v344 = vunpack.c.l.b16 %v304
        %v345 = vunpack.c.l.b16 %v305
        %v346 = vunpack.c.l.b16 %v306
        %v347 = vunpack.c.l.b16 %v307
        %v348 = vunpack.c.l.b16 %v308
        %v349 = vunpack.c.l.b16 %v309
        %v350 = vunpack.c.l.b16 %v310
        %v351 = vunpack.c.l.b16 %v311
        %v352 = vunpack.c.l.b16 %v312
        %v353 = vunpack.c.l.b16 %v313
        %v354 = vunpack.c.l.b16 %v314
        %v355 = vunpack.c.l.b16 %v315
        %v356 = vunpack.c.l.b16 %v316
        %v357 = vunpack.c.l.b16 %v317
        %v358 = vunpack.c.l.b16 %v318
        %v359 = vpack.c.b16 %v344, %v343
        %v360 = vpack.c.b16 %v346, %v345
        %v361 = vpack.c.b16 %v348, %v347
        %v362 = vpack.c.b16 %v350, %v349
        %v363 = vpack.c.b16 %v352, %v351
        %v364 = vpack.c.b16 %v354, %v353
        %v365 = vpack.c.b16 %v356, %v355
        %v366 = vpack.c.b16 %v358, %v357
        %375 = vmatprep.subr.bf16.mxu0 0
        %376 = vmatpush1.bf16.msra.mxu0 %v359
        %377 = vmatprep.subr.bf16.mxu0 0
        %378 = vmatpush1.bf16.msra.mxu0 %v360
        %379 = vmatprep.subr.bf16.mxu0 0
        %380 = vmatpush1.bf16.msra.mxu0 %v361
        %381 = vmatprep.subr.bf16.mxu0 0
        %382 = vmatpush1.bf16.msra.mxu0 %v362
        %383 = vmatprep.subr.bf16.mxu0 0
        %384 = vmatpush1.bf16.msra.mxu0 %v363
        %385 = vmatprep.subr.bf16.mxu0 0
        %386 = vmatpush1.bf16.msra.mxu0 %v364
        %387 = vmatprep.subr.bf16.mxu0 0
        %388 = vmatpush1.bf16.msra.mxu0 %v365
        %389 = vmatprep.subr.bf16.mxu0 0
        %390 = vmatpush1.bf16.msra.mxu0 %v366
        %391 = vmatprep.subr.bf16.mxu0 0
        %392 = vmatpush1.bf16.msra.mxu0 0
        %393 = vmatprep.subr.bf16.mxu0 0
        %394 = vmatpush1.bf16.msra.mxu0 0
        %395 = vmatprep.subr.bf16.mxu0 0
        %396 = vmatpush1.bf16.msra.mxu0 0
        %397 = vmatprep.subr.bf16.mxu0 0
        %398 = vmatpush1.bf16.msra.mxu0 0
        %399 = vmatprep.subr.bf16.mxu0 0
        %400 = vmatpush1.bf16.msra.mxu0 0
        %401 = vmatprep.subr.bf16.mxu0 0
        %402 = vmatpush1.bf16.msra.mxu0 0
        %403 = vmatprep.subr.bf16.mxu0 0
        %404 = vmatpush1.bf16.msra.mxu0 0
        %405 = vmatprep.subr.bf16.mxu0 0
        %406 = vmatpush1.bf16.msra.mxu0 0
        %407 = vmatprep.mubr.bf16.mxu0 0
        %408 = vmatmul.mubr.bf16.gmra.mrb[0].mxu0 %v301
        %v409 = vpop.f32.mrb[0].mxu0
        %v410 = vadd.f32 %v325, %v409
        %v411 = vpop.f32.mrb[0].mxu0
        %v412 = vpop.f32.mrb[0].mxu0
        %v413 = vpop.f32.mrb[0].mxu0
        %414 = vdwg.mxu0
        %v415 = vtanh.pop %v410
        %v416 = vpack.c.bf16 %v415, %v415
        %s417 = scalar_lea.vmem [#allocation2], 128
        %v418 = vld [vmem:[%s417] sm:$0xf]
        %v419 = vld [vmem:[%s417 + $0x4] sm:$0xf]
        %v420 = vld [vmem:[%s417 + $0x8] sm:$0xf]
        %v421 = vld [vmem:[%s417 + $0xc] sm:$0xf]
        %v422 = vld [vmem:[%s417 + $0x10] sm:$0xf]
        %v423 = vld [vmem:[%s417 + $0x14] sm:$0xf]
        %v424 = vld [vmem:[%s417 + $0x18] sm:$0xf]
        %v425 = vld [vmem:[%s417 + $0x1c] sm:$0xf]
        %v426 = vld [vmem:[%s417 + $0x20] sm:$0xf]
        %v427 = vld [vmem:[%s417 + $0x24] sm:$0xf]
        %v428 = vld [vmem:[%s417 + $0x28] sm:$0xf]
        %v429 = vld [vmem:[%s417 + $0x2c] sm:$0xf]
        %v430 = vld [vmem:[%s417 + $0x30] sm:$0xf]
        %v431 = vld [vmem:[%s417 + $0x34] sm:$0xf]
        %v432 = vld [vmem:[%s417 + $0x38] sm:$0xf]
        %v433 = vld [vmem:[%s417 + $0x3c] sm:$0xf]
        %s434 = scalar_lea.vmem %s2, 2
        %v435 = vld [vmem:[%s434] sm:$0x1]
        %v437 = vlaneseq
        %v438 = vshrl.u32 %v437, 7
        %v439 = vsub.s32 0, %v438
        %v440 = vrot.slane %v435, %v439
        %v458 = vunpack.c.l.b16 %v418
        %v459 = vunpack.c.l.b16 %v419
        %v460 = vunpack.c.l.b16 %v420
        %v461 = vunpack.c.l.b16 %v421
        %v462 = vunpack.c.l.b16 %v422
        %v463 = vunpack.c.l.b16 %v423
        %v464 = vunpack.c.l.b16 %v424
        %v465 = vunpack.c.l.b16 %v425
        %v466 = vunpack.c.l.b16 %v426
        %v467 = vunpack.c.l.b16 %v427
        %v468 = vunpack.c.l.b16 %v428
        %v469 = vunpack.c.l.b16 %v429
        %v470 = vunpack.c.l.b16 %v430
        %v471 = vunpack.c.l.b16 %v431
        %v472 = vunpack.c.l.b16 %v432
        %v473 = vunpack.c.l.b16 %v433
        %v474 = vpack.c.b16 %v459, %v458
        %v475 = vpack.c.b16 %v461, %v460
        %v476 = vpack.c.b16 %v463, %v462
        %v477 = vpack.c.b16 %v465, %v464
        %v478 = vpack.c.b16 %v467, %v466
        %v479 = vpack.c.b16 %v469, %v468
        %v480 = vpack.c.b16 %v471, %v470
        %v481 = vpack.c.b16 %v473, %v472
        %490 = vmatprep.subr.bf16.mxu0 0
        %491 = vmatpush1.bf16.msra.mxu0 %v474
        %492 = vmatprep.subr.bf16.mxu0 0
        %493 = vmatpush1.bf16.msra.mxu0 %v475
        %494 = vmatprep.subr.bf16.mxu0 0
        %495 = vmatpush1.bf16.msra.mxu0 %v476
        %496 = vmatprep.subr.bf16.mxu0 0
        %497 = vmatpush1.bf16.msra.mxu0 %v477
        %498 = vmatprep.subr.bf16.mxu0 0
        %499 = vmatpush1.bf16.msra.mxu0 %v478
        %500 = vmatprep.subr.bf16.mxu0 0
        %501 = vmatpush1.bf16.msra.mxu0 %v479
        %502 = vmatprep.subr.bf16.mxu0 0
        %503 = vmatpush1.bf16.msra.mxu0 %v480
        %504 = vmatprep.subr.bf16.mxu0 0
        %505 = vmatpush1.bf16.msra.mxu0 %v481
        %506 = vmatprep.subr.bf16.mxu0 0
        %507 = vmatpush1.bf16.msra.mxu0 0
        %508 = vmatprep.subr.bf16.mxu0 0
        %509 = vmatpush1.bf16.msra.mxu0 0
        %510 = vmatprep.subr.bf16.mxu0 0
        %511 = vmatpush1.bf16.msra.mxu0 0
        %512 = vmatprep.subr.bf16.mxu0 0
        %513 = vmatpush1.bf16.msra.mxu0 0
        %514 = vmatprep.subr.bf16.mxu0 0
        %515 = vmatpush1.bf16.msra.mxu0 0
        %516 = vmatprep.subr.bf16.mxu0 0
        %517 = vmatpush1.bf16.msra.mxu0 0
        %518 = vmatprep.subr.bf16.mxu0 0
        %519 = vmatpush1.bf16.msra.mxu0 0
        %520 = vmatprep.subr.bf16.mxu0 0
        %521 = vmatpush1.bf16.msra.mxu0 0
        %522 = vmatprep.mubr.bf16.mxu0 0
        %523 = vmatmul.mubr.bf16.gmra.mrb[0].mxu0 %v416
        %v524 = vpop.f32.mrb[0].mxu0
        %v525 = vadd.f32 %v440, %v524
        %v526 = vpop.f32.mrb[0].mxu0
        %v527 = vpop.f32.mrb[0].mxu0
        %v528 = vpop.f32.mrb[0].mxu0
        %529 = vdwg.mxu0
        %v530 = vtanh.pop %v525
        %v531 = vpack.c.bf16 %v530, %v530
        %s532 = scalar_lea.vmem [#allocation2], 192
        %v533 = vld [vmem:[%s532] sm:$0xf]
        %v534 = vld [vmem:[%s532 + $0x4] sm:$0xf]
        %v535 = vld [vmem:[%s532 + $0x8] sm:$0xf]
        %v536 = vld [vmem:[%s532 + $0xc] sm:$0xf]
        %v537 = vld [vmem:[%s532 + $0x10] sm:$0xf]
        %v538 = vld [vmem:[%s532 + $0x14] sm:$0xf]
        %v539 = vld [vmem:[%s532 + $0x18] sm:$0xf]
        %v540 = vld [vmem:[%s532 + $0x1c] sm:$0xf]
        %v541 = vld [vmem:[%s532 + $0x20] sm:$0xf]
        %v542 = vld [vmem:[%s532 + $0x24] sm:$0xf]
        %v543 = vld [vmem:[%s532 + $0x28] sm:$0xf]
        %v544 = vld [vmem:[%s532 + $0x2c] sm:$0xf]
        %v545 = vld [vmem:[%s532 + $0x30] sm:$0xf]
        %v546 = vld [vmem:[%s532 + $0x34] sm:$0xf]
        %v547 = vld [vmem:[%s532 + $0x38] sm:$0xf]
        %v548 = vld [vmem:[%s532 + $0x3c] sm:$0xf]
        %s549 = scalar_lea.vmem %s2, 3
        %v550 = vld [vmem:[%s549] sm:$0x1]
        %v552 = vlaneseq
        %v553 = vshrl.u32 %v552, 7
        %v554 = vsub.s32 0, %v553
        %v555 = vrot.slane %v550, %v554
        %v573 = vunpack.c.l.b16 %v533
        %v574 = vunpack.c.l.b16 %v534
        %v575 = vunpack.c.l.b16 %v535
        %v576 = vunpack.c.l.b16 %v536
        %v577 = vunpack.c.l.b16 %v537
        %v578 = vunpack.c.l.b16 %v538
        %v579 = vunpack.c.l.b16 %v539
        %v580 = vunpack.c.l.b16 %v540
        %v581 = vunpack.c.l.b16 %v541
        %v582 = vunpack.c.l.b16 %v542
        %v583 = vunpack.c.l.b16 %v543
        %v584 = vunpack.c.l.b16 %v544
        %v585 = vunpack.c.l.b16 %v545
        %v586 = vunpack.c.l.b16 %v546
        %v587 = vunpack.c.l.b16 %v547
        %v588 = vunpack.c.l.b16 %v548
        %v589 = vpack.c.b16 %v574, %v573
        %v590 = vpack.c.b16 %v576, %v575
        %v591 = vpack.c.b16 %v578, %v577
        %v592 = vpack.c.b16 %v580, %v579
        %v593 = vpack.c.b16 %v582, %v581
        %v594 = vpack.c.b16 %v584, %v583
        %v595 = vpack.c.b16 %v586, %v585
        %v596 = vpack.c.b16 %v588, %v587
        %605 = vmatprep.subr.bf16.mxu0 0
        %606 = vmatpush1.bf16.msra.mxu0 %v589
        %607 = vmatprep.subr.bf16.mxu0 0
        %608 = vmatpush1.bf16.msra.mxu0 %v590
        %609 = vmatprep.subr.bf16.mxu0 0
        %610 = vmatpush1.bf16.msra.mxu0 %v591
        %611 = vmatprep.subr.bf16.mxu0 0
        %612 = vmatpush1.bf16.msra.mxu0 %v592
        %613 = vmatprep.subr.bf16.mxu0 0
        %614 = vmatpush1.bf16.msra.mxu0 %v593
        %615 = vmatprep.subr.bf16.mxu0 0
        %616 = vmatpush1.bf16.msra.mxu0 %v594
        %617 = vmatprep.subr.bf16.mxu0 0
        %618 = vmatpush1.bf16.msra.mxu0 %v595
        %619 = vmatprep.subr.bf16.mxu0 0
        %620 = vmatpush1.bf16.msra.mxu0 %v596
        %621 = vmatprep.subr.bf16.mxu0 0
        %622 = vmatpush1.bf16.msra.mxu0 0
        %623 = vmatprep.subr.bf16.mxu0 0
        %624 = vmatpush1.bf16.msra.mxu0 0
        %625 = vmatprep.subr.bf16.mxu0 0
        %626 = vmatpush1.bf16.msra.mxu0 0
        %627 = vmatprep.subr.bf16.mxu0 0
        %628 = vmatpush1.bf16.msra.mxu0 0
        %629 = vmatprep.subr.bf16.mxu0 0
        %630 = vmatpush1.bf16.msra.mxu0 0
        %631 = vmatprep.subr.bf16.mxu0 0
        %632 = vmatpush1.bf16.msra.mxu0 0
        %633 = vmatprep.subr.bf16.mxu0 0
        %634 = vmatpush1.bf16.msra.mxu0 0
        %635 = vmatprep.subr.bf16.mxu0 0
        %636 = vmatpush1.bf16.msra.mxu0 0
        %637 = vmatprep.mubr.bf16.mxu0 0
        %638 = vmatmul.mubr.bf16.gmra.mrb[0].mxu0 %v531
        %v639 = vpop.f32.mrb[0].mxu0
        %v640 = vadd.f32 %v555, %v639
        %v641 = vpop.f32.mrb[0].mxu0
        %v642 = vpop.f32.mrb[0].mxu0
        %v643 = vpop.f32.mrb[0].mxu0
        %644 = vdwg.mxu0
        %v645 = vtanh.pop %v640
        %v646 = vadd.f32 %v645, %v188
        %v647 = vpack.c.bf16 %v646, %v646
        %s648 = scalar_lea.vmem [#allocation2], 256
        %v649 = vld [vmem:[%s648] sm:$0xf]
        %v650 = vld [vmem:[%s648 + $0x4] sm:$0xf]
        %v651 = vld [vmem:[%s648 + $0x8] sm:$0xf]
        %v652 = vld [vmem:[%s648 + $0xc] sm:$0xf]
        %v653 = vld [vmem:[%s648 + $0x10] sm:$0xf]
        %v654 = vld [vmem:[%s648 + $0x14] sm:$0xf]
        %v655 = vld [vmem:[%s648 + $0x18] sm:$0xf]
        %v656 = vld [vmem:[%s648 + $0x1c] sm:$0xf]
        %v657 = vld [vmem:[%s648 + $0x20] sm:$0xf]
        %v658 = vld [vmem:[%s648 + $0x24] sm:$0xf]
        %v659 = vld [vmem:[%s648 + $0x28] sm:$0xf]
        %v660 = vld [vmem:[%s648 + $0x2c] sm:$0xf]
        %v661 = vld [vmem:[%s648 + $0x30] sm:$0xf]
        %v662 = vld [vmem:[%s648 + $0x34] sm:$0xf]
        %v663 = vld [vmem:[%s648 + $0x38] sm:$0xf]
        %v664 = vld [vmem:[%s648 + $0x3c] sm:$0xf]
        %s665 = scalar_lea.vmem %s2, 4
        %v666 = vld [vmem:[%s665] sm:$0x1]
        %v668 = vlaneseq
        %v669 = vshrl.u32 %v668, 7
        %v670 = vsub.s32 0, %v669
        %v671 = vrot.slane %v666, %v670
        %v689 = vunpack.c.l.b16 %v649
        %v690 = vunpack.c.l.b16 %v650
        %v691 = vunpack.c.l.b16 %v651
        %v692 = vunpack.c.l.b16 %v652
        %v693 = vunpack.c.l.b16 %v653
        %v694 = vunpack.c.l.b16 %v654
        %v695 = vunpack.c.l.b16 %v655
        %v696 = vunpack.c.l.b16 %v656
        %v697 = vunpack.c.l.b16 %v657
        %v698 = vunpack.c.l.b16 %v658
        %v699 = vunpack.c.l.b16 %v659
        %v700 = vunpack.c.l.b16 %v660
        %v701 = vunpack.c.l.b16 %v661
        %v702 = vunpack.c.l.b16 %v662
        %v703 = vunpack.c.l.b16 %v663
        %v704 = vunpack.c.l.b16 %v664
        %v705 = vpack.c.b16 %v690, %v689
        %v706 = vpack.c.b16 %v692, %v691
        %v707 = vpack.c.b16 %v694, %v693
        %v708 = vpack.c.b16 %v696, %v695
        %v709 = vpack.c.b16 %v698, %v697
        %v710 = vpack.c.b16 %v700, %v699
        %v711 = vpack.c.b16 %v702, %v701
        %v712 = vpack.c.b16 %v704, %v703
        %721 = vmatprep.subr.bf16.mxu0 0
        %722 = vmatpush1.bf16.msra.mxu0 %v705
        %723 = vmatprep.subr.bf16.mxu0 0
        %724 = vmatpush1.bf16.msra.mxu0 %v706
        %725 = vmatprep.subr.bf16.mxu0 0
        %726 = vmatpush1.bf16.msra.mxu0 %v707
        %727 = vmatprep.subr.bf16.mxu0 0
        %728 = vmatpush1.bf16.msra.mxu0 %v708
        %729 = vmatprep.subr.bf16.mxu0 0
        %730 = vmatpush1.bf16.msra.mxu0 %v709
        %731 = vmatprep.subr.bf16.mxu0 0
        %732 = vmatpush1.bf16.msra.mxu0 %v710
        %733 = vmatprep.subr.bf16.mxu0 0
        %734 = vmatpush1.bf16.msra.mxu0 %v711
        %735 = vmatprep.subr.bf16.mxu0 0
        %736 = vmatpush1.bf16.msra.mxu0 %v712
        %737 = vmatprep.subr.bf16.mxu0 0
        %738 = vmatpush1.bf16.msra.mxu0 0
        %739 = vmatprep.subr.bf16.mxu0 0
        %740 = vmatpush1.bf16.msra.mxu0 0
        %741 = vmatprep.subr.bf16.mxu0 0
        %742 = vmatpush1.bf16.msra.mxu0 0
        %743 = vmatprep.subr.bf16.mxu0 0
        %744 = vmatpush1.bf16.msra.mxu0 0
        %745 = vmatprep.subr.bf16.mxu0 0
        %746 = vmatpush1.bf16.msra.mxu0 0
        %747 = vmatprep.subr.bf16.mxu0 0
        %748 = vmatpush1.bf16.msra.mxu0 0
        %749 = vmatprep.subr.bf16.mxu0 0
        %750 = vmatpush1.bf16.msra.mxu0 0
        %751 = vmatprep.subr.bf16.mxu0 0
        %752 = vmatpush1.bf16.msra.mxu0 0
        %753 = vmatprep.mubr.bf16.mxu0 0
        %754 = vmatmul.mubr.bf16.gmra.mrb[0].mxu0 %v647
        %v755 = vpop.f32.mrb[0].mxu0
        %v756 = vadd.f32 %v671, %v755
        %v757 = vpop.f32.mrb[0].mxu0
        %v758 = vpop.f32.mrb[0].mxu0
        %v759 = vpop.f32.mrb[0].mxu0
        %760 = vdwg.mxu0
        %v761 = vtanh.pop %v756
        %v762 = vpack.c.bf16 %v761, %v761
        %s763 = scalar_lea.vmem [#allocation2], 320
        %v764 = vld [vmem:[%s763] sm:$0xf]
        %v765 = vld [vmem:[%s763 + $0x4] sm:$0xf]
        %v766 = vld [vmem:[%s763 + $0x8] sm:$0xf]
        %v767 = vld [vmem:[%s763 + $0xc] sm:$0xf]
        %v768 = vld [vmem:[%s763 + $0x10] sm:$0xf]
        %v769 = vld [vmem:[%s763 + $0x14] sm:$0xf]
        %v770 = vld [vmem:[%s763 + $0x18] sm:$0xf]
        %v771 = vld [vmem:[%s763 + $0x1c] sm:$0xf]
        %v772 = vld [vmem:[%s763 + $0x20] sm:$0xf]
        %v773 = vld [vmem:[%s763 + $0x24] sm:$0xf]
        %v774 = vld [vmem:[%s763 + $0x28] sm:$0xf]
        %v775 = vld [vmem:[%s763 + $0x2c] sm:$0xf]
        %v776 = vld [vmem:[%s763 + $0x30] sm:$0xf]
        %v777 = vld [vmem:[%s763 + $0x34] sm:$0xf]
        %v778 = vld [vmem:[%s763 + $0x38] sm:$0xf]
        %v779 = vld [vmem:[%s763 + $0x3c] sm:$0xf]
        %s780 = scalar_lea.vmem %s2, 5
        %v781 = vld [vmem:[%s780] sm:$0x1]
        %v783 = vlaneseq
        %v784 = vshrl.u32 %v783, 7
        %v785 = vsub.s32 0, %v784
        %v786 = vrot.slane %v781, %v785
        %v804 = vunpack.c.l.b16 %v764
        %v805 = vunpack.c.l.b16 %v765
        %v806 = vunpack.c.l.b16 %v766
        %v807 = vunpack.c.l.b16 %v767
        %v808 = vunpack.c.l.b16 %v768
        %v809 = vunpack.c.l.b16 %v769
        %v810 = vunpack.c.l.b16 %v770
        %v811 = vunpack.c.l.b16 %v771
        %v812 = vunpack.c.l.b16 %v772
        %v813 = vunpack.c.l.b16 %v773
        %v814 = vunpack.c.l.b16 %v774
        %v815 = vunpack.c.l.b16 %v775
        %v816 = vunpack.c.l.b16 %v776
        %v817 = vunpack.c.l.b16 %v777
        %v818 = vunpack.c.l.b16 %v778
        %v819 = vunpack.c.l.b16 %v779
        %v820 = vpack.c.b16 %v805, %v804
        %v821 = vpack.c.b16 %v807, %v806
        %v822 = vpack.c.b16 %v809, %v808
        %v823 = vpack.c.b16 %v811, %v810
        %v824 = vpack.c.b16 %v813, %v812
        %v825 = vpack.c.b16 %v815, %v814
        %v826 = vpack.c.b16 %v817, %v816
        %v827 = vpack.c.b16 %v819, %v818
        %836 = vmatprep.subr.bf16.mxu0 0
        %837 = vmatpush1.bf16.msra.mxu0 %v820
        %838 = vmatprep.subr.bf16.mxu0 0
        %839 = vmatpush1.bf16.msra.mxu0 %v821
        %840 = vmatprep.subr.bf16.mxu0 0
        %841 = vmatpush1.bf16.msra.mxu0 %v822
        %842 = vmatprep.subr.bf16.mxu0 0
        %843 = vmatpush1.bf16.msra.mxu0 %v823
        %844 = vmatprep.subr.bf16.mxu0 0
        %845 = vmatpush1.bf16.msra.mxu0 %v824
        %846 = vmatprep.subr.bf16.mxu0 0
        %847 = vmatpush1.bf16.msra.mxu0 %v825
        %848 = vmatprep.subr.bf16.mxu0 0
        %849 = vmatpush1.bf16.msra.mxu0 %v826
        %850 = vmatprep.subr.bf16.mxu0 0
        %851 = vmatpush1.bf16.msra.mxu0 %v827
        %852 = vmatprep.subr.bf16.mxu0 0
        %853 = vmatpush1.bf16.msra.mxu0 0
        %854 = vmatprep.subr.bf16.mxu0 0
        %855 = vmatpush1.bf16.msra.mxu0 0
        %856 = vmatprep.subr.bf16.mxu0 0
        %857 = vmatpush1.bf16.msra.mxu0 0
        %858 = vmatprep.subr.bf16.mxu0 0
        %859 = vmatpush1.bf16.msra.mxu0 0
        %860 = vmatprep.subr.bf16.mxu0 0
        %861 = vmatpush1.bf16.msra.mxu0 0
        %862 = vmatprep.subr.bf16.mxu0 0
        %863 = vmatpush1.bf16.msra.mxu0 0
        %864 = vmatprep.subr.bf16.mxu0 0
        %865 = vmatpush1.bf16.msra.mxu0 0
        %866 = vmatprep.subr.bf16.mxu0 0
        %867 = vmatpush1.bf16.msra.mxu0 0
        %868 = vmatprep.mubr.bf16.mxu0 0
        %869 = vmatmul.mubr.bf16.gmra.mrb[0].mxu0 %v762
        %v870 = vpop.f32.mrb[0].mxu0
        %v871 = vadd.f32 %v786, %v870
        %v872 = vpop.f32.mrb[0].mxu0
        %v873 = vpop.f32.mrb[0].mxu0
        %v874 = vpop.f32.mrb[0].mxu0
        %875 = vdwg.mxu0
        %v876 = vtanh.pop %v871
        %v877 = vpack.c.bf16 %v876, %v876
        %s878 = scalar_lea.vmem [#allocation2], 384
        %v879 = vld [vmem:[%s878] sm:$0xf]
        %v880 = vld [vmem:[%s878 + $0x4] sm:$0xf]
        %v881 = vld [vmem:[%s878 + $0x8] sm:$0xf]
        %v882 = vld [vmem:[%s878 + $0xc] sm:$0xf]
        %v883 = vld [vmem:[%s878 + $0x10] sm:$0xf]
        %v884 = vld [vmem:[%s878 + $0x14] sm:$0xf]
        %v885 = vld [vmem:[%s878 + $0x18] sm:$0xf]
        %v886 = vld [vmem:[%s878 + $0x1c] sm:$0xf]
        %v887 = vld [vmem:[%s878 + $0x20] sm:$0xf]
        %v888 = vld [vmem:[%s878 + $0x24] sm:$0xf]
        %v889 = vld [vmem:[%s878 + $0x28] sm:$0xf]
        %v890 = vld [vmem:[%s878 + $0x2c] sm:$0xf]
        %v891 = vld [vmem:[%s878 + $0x30] sm:$0xf]
        %v892 = vld [vmem:[%s878 + $0x34] sm:$0xf]
        %v893 = vld [vmem:[%s878 + $0x38] sm:$0xf]
        %v894 = vld [vmem:[%s878 + $0x3c] sm:$0xf]
        %s895 = scalar_lea.vmem %s2, 6
        %v896 = vld [vmem:[%s895] sm:$0x1]
        %v898 = vlaneseq
        %v899 = vshrl.u32 %v898, 7
        %v900 = vsub.s32 0, %v899
        %v901 = vrot.slane %v896, %v900
        %v919 = vunpack.c.l.b16 %v879
        %v920 = vunpack.c.l.b16 %v880
        %v921 = vunpack.c.l.b16 %v881
        %v922 = vunpack.c.l.b16 %v882
        %v923 = vunpack.c.l.b16 %v883
        %v924 = vunpack.c.l.b16 %v884
        %v925 = vunpack.c.l.b16 %v885
        %v926 = vunpack.c.l.b16 %v886
        %v927 = vunpack.c.l.b16 %v887
        %v928 = vunpack.c.l.b16 %v888
        %v929 = vunpack.c.l.b16 %v889
        %v930 = vunpack.c.l.b16 %v890
        %v931 = vunpack.c.l.b16 %v891
        %v932 = vunpack.c.l.b16 %v892
        %v933 = vunpack.c.l.b16 %v893
        %v934 = vunpack.c.l.b16 %v894
        %v935 = vpack.c.b16 %v920, %v919
        %v936 = vpack.c.b16 %v922, %v921
        %v937 = vpack.c.b16 %v924, %v923
        %v938 = vpack.c.b16 %v926, %v925
        %v939 = vpack.c.b16 %v928, %v927
        %v940 = vpack.c.b16 %v930, %v929
        %v941 = vpack.c.b16 %v932, %v931
        %v942 = vpack.c.b16 %v934, %v933
        %951 = vmatprep.subr.bf16.mxu0 0
        %952 = vmatpush1.bf16.msra.mxu0 %v935
        %953 = vmatprep.subr.bf16.mxu0 0
        %954 = vmatpush1.bf16.msra.mxu0 %v936
        %955 = vmatprep.subr.bf16.mxu0 0
        %956 = vmatpush1.bf16.msra.mxu0 %v937
        %957 = vmatprep.subr.bf16.mxu0 0
        %958 = vmatpush1.bf16.msra.mxu0 %v938
        %959 = vmatprep.subr.bf16.mxu0 0
        %960 = vmatpush1.bf16.msra.mxu0 %v939
        %961 = vmatprep.subr.bf16.mxu0 0
        %962 = vmatpush1.bf16.msra.mxu0 %v940
        %963 = vmatprep.subr.bf16.mxu0 0
        %964 = vmatpush1.bf16.msra.mxu0 %v941
        %965 = vmatprep.subr.bf16.mxu0 0
        %966 = vmatpush1.bf16.msra.mxu0 %v942
        %967 = vmatprep.subr.bf16.mxu0 0
        %968 = vmatpush1.bf16.msra.mxu0 0
        %969 = vmatprep.subr.bf16.mxu0 0
        %970 = vmatpush1.bf16.msra.mxu0 0
        %971 = vmatprep.subr.bf16.mxu0 0
        %972 = vmatpush1.bf16.msra.mxu0 0
        %973 = vmatprep.subr.bf16.mxu0 0
        %974 = vmatpush1.bf16.msra.mxu0 0
        %975 = vmatprep.subr.bf16.mxu0 0
        %976 = vmatpush1.bf16.msra.mxu0 0
        %977 = vmatprep.subr.bf16.mxu0 0
        %978 = vmatpush1.bf16.msra.mxu0 0
        %979 = vmatprep.subr.bf16.mxu0 0
        %980 = vmatpush1.bf16.msra.mxu0 0
        %981 = vmatprep.subr.bf16.mxu0 0
        %982 = vmatpush1.bf16.msra.mxu0 0
        %983 = vmatprep.mubr.bf16.mxu0 0
        %984 = vmatmul.mubr.bf16.gmra.mrb[0].mxu0 %v877
        %v985 = vpop.f32.mrb[0].mxu0
        %v986 = vadd.f32 %v901, %v985
        %v987 = vpop.f32.mrb[0].mxu0
        %v988 = vpop.f32.mrb[0].mxu0
        %v989 = vpop.f32.mrb[0].mxu0
        %990 = vdwg.mxu0
        %v991 = vtanh.pop %v986
        %v992 = vpack.c.bf16 %v991, %v991
        %s993 = scalar_lea.vmem [#allocation2], 448
        %v994 = vld [vmem:[%s993] sm:$0xf]
        %v995 = vld [vmem:[%s993 + $0x4] sm:$0xf]
        %v996 = vld [vmem:[%s993 + $0x8] sm:$0xf]
        %v997 = vld [vmem:[%s993 + $0xc] sm:$0xf]
        %v998 = vld [vmem:[%s993 + $0x10] sm:$0xf]
        %v999 = vld [vmem:[%s993 + $0x14] sm:$0xf]
        %v1000 = vld [vmem:[%s993 + $0x18] sm:$0xf]
        %v1001 = vld [vmem:[%s993 + $0x1c] sm:$0xf]
        %v1002 = vld [vmem:[%s993 + $0x20] sm:$0xf]
        %v1003 = vld [vmem:[%s993 + $0x24] sm:$0xf]
        %v1004 = vld [vmem:[%s993 + $0x28] sm:$0xf]
        %v1005 = vld [vmem:[%s993 + $0x2c] sm:$0xf]
        %v1006 = vld [vmem:[%s993 + $0x30] sm:$0xf]
        %v1007 = vld [vmem:[%s993 + $0x34] sm:$0xf]
        %v1008 = vld [vmem:[%s993 + $0x38] sm:$0xf]
        %v1009 = vld [vmem:[%s993 + $0x3c] sm:$0xf]
        %s1010 = scalar_lea.vmem %s2, 7
        %v1011 = vld [vmem:[%s1010] sm:$0x1]
        %v1013 = vlaneseq
        %v1014 = vshrl.u32 %v1013, 7
        %v1015 = vsub.s32 0, %v1014
        %v1016 = vrot.slane %v1011, %v1015
        %v1034 = vunpack.c.l.b16 %v994
        %v1035 = vunpack.c.l.b16 %v995
        %v1036 = vunpack.c.l.b16 %v996
        %v1037 = vunpack.c.l.b16 %v997
        %v1038 = vunpack.c.l.b16 %v998
        %v1039 = vunpack.c.l.b16 %v999
        %v1040 = vunpack.c.l.b16 %v1000
        %v1041 = vunpack.c.l.b16 %v1001
        %v1042 = vunpack.c.l.b16 %v1002
        %v1043 = vunpack.c.l.b16 %v1003
        %v1044 = vunpack.c.l.b16 %v1004
        %v1045 = vunpack.c.l.b16 %v1005
        %v1046 = vunpack.c.l.b16 %v1006
        %v1047 = vunpack.c.l.b16 %v1007
        %v1048 = vunpack.c.l.b16 %v1008
        %v1049 = vunpack.c.l.b16 %v1009
        %v1050 = vpack.c.b16 %v1035, %v1034
        %v1051 = vpack.c.b16 %v1037, %v1036
        %v1052 = vpack.c.b16 %v1039, %v1038
        %v1053 = vpack.c.b16 %v1041, %v1040
        %v1054 = vpack.c.b16 %v1043, %v1042
        %v1055 = vpack.c.b16 %v1045, %v1044
        %v1056 = vpack.c.b16 %v1047, %v1046
        %v1057 = vpack.c.b16 %v1049, %v1048
        %1066 = vmatprep.subr.bf16.mxu0 0
        %1067 = vmatpush1.bf16.msra.mxu0 %v1050
        %1068 = vmatprep.subr.bf16.mxu0 0
        %1069 = vmatpush1.bf16.msra.mxu0 %v1051
        %1070 = vmatprep.subr.bf16.mxu0 0
        %1071 = vmatpush1.bf16.msra.mxu0 %v1052
        %1072 = vmatprep.subr.bf16.mxu0 0
        %1073 = vmatpush1.bf16.msra.mxu0 %v1053
        %1074 = vmatprep.subr.bf16.mxu0 0
        %1075 = vmatpush1.bf16.msra.mxu0 %v1054
        %1076 = vmatprep.subr.bf16.mxu0 0
        %1077 = vmatpush1.bf16.msra.mxu0 %v1055
        %1078 = vmatprep.subr.bf16.mxu0 0
        %1079 = vmatpush1.bf16.msra.mxu0 %v1056
        %1080 = vmatprep.subr.bf16.mxu0 0
        %1081 = vmatpush1.bf16.msra.mxu0 %v1057
        %1082 = vmatprep.subr.bf16.mxu0 0
        %1083 = vmatpush1.bf16.msra.mxu0 0
        %1084 = vmatprep.subr.bf16.mxu0 0
        %1085 = vmatpush1.bf16.msra.mxu0 0
        %1086 = vmatprep.subr.bf16.mxu0 0
        %1087 = vmatpush1.bf16.msra.mxu0 0
        %1088 = vmatprep.subr.bf16.mxu0 0
        %1089 = vmatpush1.bf16.msra.mxu0 0
        %1090 = vmatprep.subr.bf16.mxu0 0
        %1091 = vmatpush1.bf16.msra.mxu0 0
        %1092 = vmatprep.subr.bf16.mxu0 0
        %1093 = vmatpush1.bf16.msra.mxu0 0
        %1094 = vmatprep.subr.bf16.mxu0 0
        %1095 = vmatpush1.bf16.msra.mxu0 0
        %1096 = vmatprep.subr.bf16.mxu0 0
        %1097 = vmatpush1.bf16.msra.mxu0 0
        %1098 = vmatprep.mubr.bf16.mxu0 0
        %1099 = vmatmul.mubr.bf16.gmra.mrb[0].mxu0 %v992
        %v1100 = vpop.f32.mrb[0].mxu0
        %v1101 = vadd.f32 %v1016, %v1100
        %v1102 = vpop.f32.mrb[0].mxu0
        %v1103 = vpop.f32.mrb[0].mxu0
        %v1104 = vpop.f32.mrb[0].mxu0
        %1105 = vdwg.mxu0
        %v1106 = vtanh.pop %v1101
        %v1107 = vadd.f32 %v645, %v1106
        %1108 = vst [vmem:[%s180] sm:$0xff] %v1107
        %p1109 = scmp.lt.s32.totalorder %s15, 1
        %s1110 = scalar_select %p1109, %s15, 1
        %s1111 = smul.addr %s1110, 8
        %s1112 = scalar_lea.vmem %s3, %s1111
        // Predicated region
        $region37: #{ml_model_forward.1} parent=31 // pred_check
          %p1113 = pneg %p101
        $region38: #{ml_model_forward.1} parent=31 // pred_check_branch
          %1115 = sbr.rel (%p1113) target = $region40
        $region39: #{ml_model_forward.1} parent=31 // pred_region
          _
        $region40: #{ml_model_forward.1} parent=31 // pred_fallthru
          _
      $region32: #{ml_model_forward.1} parent=5 // pred_fallthru
        _
      %p1116 = scmp.le.s32.totalorder 2, %s10
      // Predicated region
      $region41: #{ml_model_forward.1} parent=5 // pred_check
        %p1117 = pneg %p1116
      $region42: #{ml_model_forward.1} parent=5 // pred_check_branch
        %1119 = sbr.rel (%p1117) target = $region44
      $region43: #{ml_model_forward.1} parent=5 // pred_region
        %s1120 = ssub.s32 %s10, 2
        // Predicated region
        $region45: #{ml_model_forward.1} parent=43 // pred_check
          %p1121 = pneg %p107
        $region46: #{ml_model_forward.1} parent=43 // pred_check_branch
          %1123 = sbr.rel (%p1121) target = $region48
        $region47: #{ml_model_forward.1} parent=43 // pred_region
          %p1124 = scmp.lt.s32.totalorder %s16, 1
          %s1125 = scalar_select %p1124, %s16, 1
          %s1126 = smul.addr %s1125, 8
          %s1127 = scalar_lea.vmem %s3, %s1126
        $region48: #{ml_model_forward.1} parent=43 // pred_fallthru
          _
      $region44: #{ml_model_forward.1} parent=5 // pred_fallthru
        _
    $region6: #{ml_model_forward.1} parent=1 // loop_footer
      %s14 = sadd.s32 1, %s10
    $region7: #{ml_model_forward.1} parent=1 // loop_footer_branch
      %9 = sbr.rel target = $region3
    $region8: #{ml_model_forward.1} parent=1 // loop_exit
      _
    %1128 = vsyncpa [#allocation3], 1
    %s1129 = scalar_lea.sflag [#allocation3], 1
    %1130 = vsyncpa %s1129, 1

</llo_original>
